<compile_context>
chip_gen: v6e
topology: v6e:2x2x1
jax: 0.10.0
libtpu: 0.0.40
codegen_flags: <defaults>
</compile_context>

<pallas_src>
import functools
import math

import jax
import jax.numpy as jnp
from jax.experimental import pallas as pl
from jax.experimental.pallas import tpu as pltpu


def _round_up(x, m):
    return (x + m - 1) // m * m


def _fused_mlp_kernel(*refs, n_layers):
    # refs = (x_ref, w0, b0, w1, b1, ..., w{L-1}, b{L-1}, o_ref)
    #   x_ref : (K0, tm)    features x batch-on-lanes
    #   w_l   : (N_l, K_l)  PyTorch nn.Linear.weight layout (out, in)
    #   b_l   : (N_l, 1)    broadcasts along the lane (batch) axis
    #   o_ref : (N_out, tm)
    x_ref = refs[0]
    o_ref = refs[-1]
    h = x_ref[...]
    for l in range(n_layers):
        w = refs[1 + 2 * l][...]
        b = refs[2 + 2 * l][...]
        h = jnp.dot(w, h, preferred_element_type=jnp.float32) + b
        if l < n_layers - 1:              # no activation after the final layer
            h = jnp.maximum(h, 0.0)
    o_ref[...] = h.astype(o_ref.dtype)


def fused_mlp_forward(params, x, *, tm=None):
    """Fused Linear->ReLU->...->Linear forward.

    params: list of (w, b) with w: (out, in) f32 (PyTorch layout), b: (out,) f32.
    x: (M, in0) f32.  Any M is accepted (batch padded up to a multiple of tm).
    Returns (M, out_last) f32, identical to F.linear chaining.
    """
    M, K0 = x.shape
    n_layers = len(params)
    N_out = params[-1][0].shape[0]

    # Lane-dense row tile: multiple of 128, >= 2 grid steps when batch allows
    # (v7x megacore), capped at 2048 to amortize the ~0.35 us per-step cost.
    if tm is None:
        tm = min(max(_round_up(pl.cdiv(M, 2), 128), 128), 2048)
    assert tm % 128 == 0, "tm must be a multiple of 128 (lane width)"

    M_pad = _round_up(M, tm)

    # Batch on lanes: (M, K0) -> (K0, M_pad).  Padded columns compute garbage
    # (bias only) and are sliced off at the end.
    x_t = x.T
    if M_pad != M:
        x_t = jnp.pad(x_t, ((0, 0), (0, M_pad - M)))

    flat_inputs = [x_t]
    in_specs = [pl.BlockSpec((K0, tm), lambda i: (0, i))]

    # VMEM budget (bytes): double-buffered x/out tiles + single-buffered
    # weights/biases + per-layer intermediate activations.
    vmem_bytes = 2 * K0 * tm * 4 + 2 * N_out * tm * 4

    for (w, b) in params:
        Ni, Ki = w.shape
        assert b.shape == (Ni,)
        flat_inputs.append(w)
        flat_inputs.append(b.reshape(Ni, 1))
        # Grid-invariant blocks: fetched once, stay VMEM-resident; a single
        # buffer is enough (constant index_map -> no pipelining needed).
        in_specs.append(
            pl.BlockSpec((Ni, Ki), lambda i: (0, 0),
                         pipeline_mode=pl.Buffered(1)))
        in_specs.append(
            pl.BlockSpec((Ni, 1), lambda i: (0, 0),
                         pipeline_mode=pl.Buffered(1)))
        vmem_bytes += (Ni * Ki + Ni) * 4      # resident weights + bias
        vmem_bytes += Ni * tm * 4             # intermediate activation

    # Explicit VMEM gate: raise the scoped limit only if the resident-weights
    # design outgrows the 32 MiB default (cap at v7x's 64 MiB physical VMEM).
    compiler_kwargs = {}
    if vmem_bytes > 32 * 1024 * 1024:
        compiler_kwargs["vmem_limit_bytes"] = min(
            _round_up(2 * vmem_bytes, 1 << 20), 64 * 1024 * 1024)

    kernel = functools.partial(_fused_mlp_kernel, n_layers=n_layers)

    out_t = pl.pallas_call(
        kernel,
        out_shape=jax.ShapeDtypeStruct((N_out, M_pad), jnp.float32),
        grid_spec=pltpu.PrefetchScalarGridSpec(
            num_scalar_prefetch=0,
            grid=(M_pad // tm,),
            in_specs=in_specs,
            out_specs=pl.BlockSpec((N_out, tm), lambda i: (0, i)),
        ),
        compiler_params=pltpu.CompilerParams(
            dimension_semantics=("parallel",),
            **compiler_kwargs,
        ),
    )(*flat_inputs)

    out = out_t.T                              # (M_pad, N_out)
    return out[:M] if M_pad != M else out


# JIT'd entry point: one executable, one dispatch, params as a pytree arg.
siamese_forward = jax.jit(fused_mlp_forward, static_argnames=("tm",))


def init_siamese_params(layer_sizes, key):
    """xavier_normal_ weights (module's default init path) in PyTorch-native
    (out, in) layout, zero biases (deterministic stand-in for nn.Linear's
    default bias init)."""
    params = []
    for idx in range(len(layer_sizes) - 1):
        fan_in, fan_out = layer_sizes[idx], layer_sizes[idx + 1]
        key, sub = jax.random.split(key)
        std = math.sqrt(2.0 / (fan_in + fan_out))  # xavier normal, gain=1
        w = std * jax.random.normal(sub, (fan_out, fan_in), dtype=jnp.float32)
        b = jnp.zeros((fan_out,), dtype=jnp.float32)
        params.append((w, b))
    return params


def siamese_reference(params, x):
    out = x
    n_layers = len(params)
    for idx, (w, b) in enumerate(params):
        out = out @ w.T + b                    # == F.linear(out, w, b)
        if idx < n_layers - 1:
            out = jnp.maximum(out, 0.0)
    return out


if __name__ == "__main__":
    layer_sizes = (32, 64, 48, 16)   # MLP: 32 -> 64 -> 48 -> 16
    batch = 256                       # tm=128 -> grid=(2,), both v7x TCs busy

    key = jax.random.PRNGKey(0)
    key, xkey = jax.random.split(key)
    x = jax.random.normal(xkey, (batch, layer_sizes[0]), dtype=jnp.float32)

    params = init_siamese_params(layer_sizes, key)

    out = jax.block_until_ready(siamese_forward(params, x))
    ref = siamese_reference(params, x)
    assert out.shape == (batch, layer_sizes[-1])
    assert jnp.allclose(out, ref, atol=1e-4, rtol=1e-4), "mismatch vs reference"

    # Batch that is not a multiple of the 128-lane tile (exercises padding).
    x_small = x[:10]
    out_small = jax.block_until_ready(siamese_forward(params, x_small))
    assert jnp.allclose(out_small, siamese_reference(params, x_small),
                        atol=1e-4, rtol=1e-4), "mismatch vs reference (padded)"

    print("KERNEL_OK")
</pallas_src>

<mosaic_0001>
module attributes {stable_mosaic.version = 11 : i64} {
  func.func @_fused_mlp_kernel(%arg0: i32, %arg1: memref<32x128xf32, #tpu.memory_space<vmem>>, %arg2: memref<64x32xf32, #tpu.memory_space<vmem>>, %arg3: memref<64x1xf32, #tpu.memory_space<vmem>>, %arg4: memref<48x64xf32, #tpu.memory_space<vmem>>, %arg5: memref<48x1xf32, #tpu.memory_space<vmem>>, %arg6: memref<16x48xf32, #tpu.memory_space<vmem>>, %arg7: memref<16x1xf32, #tpu.memory_space<vmem>>, %arg8: memref<16x128xf32, #tpu.memory_space<vmem>>) attributes {dimension_semantics = [#tpu.dimension_semantics<parallel>], iteration_bounds = array<i64: 2>, scalar_prefetch = 0 : i64, scratch_operands = 0 : i64, tpu.core_type = #tpu.core_type<tc>, window_params = [{transform_indices = @transform_0, window_bounds = array<i64: 32, 128>}, {pipeline_mode = #tpu.pipeline_mode<synchronous>, transform_indices = @transform_1, window_bounds = array<i64: 64, 32>}, {pipeline_mode = #tpu.pipeline_mode<synchronous>, transform_indices = @transform_2, window_bounds = array<i64: 64, 1>}, {pipeline_mode = #tpu.pipeline_mode<synchronous>, transform_indices = @transform_3, window_bounds = array<i64: 48, 64>}, {pipeline_mode = #tpu.pipeline_mode<synchronous>, transform_indices = @transform_4, window_bounds = array<i64: 48, 1>}, {pipeline_mode = #tpu.pipeline_mode<synchronous>, transform_indices = @transform_5, window_bounds = array<i64: 16, 48>}, {pipeline_mode = #tpu.pipeline_mode<synchronous>, transform_indices = @transform_6, window_bounds = array<i64: 16, 1>}, {transform_indices = @transform_7, window_bounds = array<i64: 16, 128>}]} {
    %c0 = arith.constant 0 : index
    %c0_0 = arith.constant 0 : index
    %0 = vector.load %arg1[%c0, %c0_0] : memref<32x128xf32, #tpu.memory_space<vmem>>, vector<32x128xf32>
    %c0_1 = arith.constant 0 : index
    %c0_2 = arith.constant 0 : index
    %1 = vector.load %arg2[%c0_1, %c0_2] : memref<64x32xf32, #tpu.memory_space<vmem>>, vector<64x32xf32>
    %c0_3 = arith.constant 0 : index
    %c0_4 = arith.constant 0 : index
    %2 = vector.load %arg3[%c0_3, %c0_4] : memref<64x1xf32, #tpu.memory_space<vmem>>, vector<64x1xf32>
    %cst = arith.constant dense<0.000000e+00> : vector<64x128xf32>
    %3 = tpu.matmul %1, %0, %cst {dimension_numbers = #tpu.dot_dimension_numbers<[1], [0], [0], [1], [0, 0, 1, 1], [], []>} : vector<64x32xf32>, vector<32x128xf32>, vector<64x128xf32> -> vector<64x128xf32>
    %4 = vector.broadcast %2 : vector<64x1xf32> to vector<64x128xf32>
    %5 = arith.addf %3, %4 : vector<64x128xf32>
    %cst_5 = arith.constant 0.000000e+00 : f32
    %6 = vector.broadcast %cst_5 : f32 to vector<64x128xf32>
    %7 = arith.maximumf %5, %6 : vector<64x128xf32>
    %c0_6 = arith.constant 0 : index
    %c0_7 = arith.constant 0 : index
    %8 = vector.load %arg4[%c0_6, %c0_7] : memref<48x64xf32, #tpu.memory_space<vmem>>, vector<48x64xf32>
    %c0_8 = arith.constant 0 : index
    %c0_9 = arith.constant 0 : index
    %9 = vector.load %arg5[%c0_8, %c0_9] : memref<48x1xf32, #tpu.memory_space<vmem>>, vector<48x1xf32>
    %cst_10 = arith.constant dense<0.000000e+00> : vector<48x128xf32>
    %10 = tpu.matmul %8, %7, %cst_10 {dimension_numbers = #tpu.dot_dimension_numbers<[1], [0], [0], [1], [0, 0, 1, 1], [], []>} : vector<48x64xf32>, vector<64x128xf32>, vector<48x128xf32> -> vector<48x128xf32>
    %11 = vector.broadcast %9 : vector<48x1xf32> to vector<48x128xf32>
    %12 = arith.addf %10, %11 : vector<48x128xf32>
    %cst_11 = arith.constant 0.000000e+00 : f32
    %13 = vector.broadcast %cst_11 : f32 to vector<48x128xf32>
    %14 = arith.maximumf %12, %13 : vector<48x128xf32>
    %c0_12 = arith.constant 0 : index
    %c0_13 = arith.constant 0 : index
    %15 = vector.load %arg6[%c0_12, %c0_13] : memref<16x48xf32, #tpu.memory_space<vmem>>, vector<16x48xf32>
    %c0_14 = arith.constant 0 : index
    %c0_15 = arith.constant 0 : index
    %16 = vector.load %arg7[%c0_14, %c0_15] : memref<16x1xf32, #tpu.memory_space<vmem>>, vector<16x1xf32>
    %cst_16 = arith.constant dense<0.000000e+00> : vector<16x128xf32>
    %17 = tpu.matmul %15, %14, %cst_16 {dimension_numbers = #tpu.dot_dimension_numbers<[1], [0], [0], [1], [0, 0, 1, 1], [], []>} : vector<16x48xf32>, vector<48x128xf32>, vector<16x128xf32> -> vector<16x128xf32>
    %18 = vector.broadcast %16 : vector<16x1xf32> to vector<16x128xf32>
    %19 = arith.addf %17, %18 : vector<16x128xf32>
    %c0_17 = arith.constant 0 : index
    %c0_18 = arith.constant 0 : index
    %20 = vector.load %arg8[%c0_17, %c0_18] : memref<16x128xf32, #tpu.memory_space<vmem>>, vector<16x128xf32>
    tpu.vector_store %arg8[%c0_17, %c0_18], %19 {strides = array<i32>} : memref<16x128xf32, #tpu.memory_space<vmem>>, vector<16x128xf32>,
    return
  }
  func.func @transform_0(%arg0: i32) -> (i32, i32) {
    %c0_i32 = arith.constant 0 : i32
    %c0_i32_0 = arith.constant 0 : i32
    return %c0_i32, %arg0 : i32, i32
  }
  func.func @transform_1(%arg0: i32) -> (i32, i32) {
    %c0_i32 = arith.constant 0 : i32
    %c0_i32_0 = arith.constant 0 : i32
    %c0_i32_1 = arith.constant 0 : i32
    return %c0_i32, %c0_i32_0 : i32, i32
  }
  func.func @transform_2(%arg0: i32) -> (i32, i32) {
    %c0_i32 = arith.constant 0 : i32
    %c0_i32_0 = arith.constant 0 : i32
    %c0_i32_1 = arith.constant 0 : i32
    return %c0_i32, %c0_i32_0 : i32, i32
  }
  func.func @transform_3(%arg0: i32) -> (i32, i32) {
    %c0_i32 = arith.constant 0 : i32
    %c0_i32_0 = arith.constant 0 : i32
    %c0_i32_1 = arith.constant 0 : i32
    return %c0_i32, %c0_i32_0 : i32, i32
  }
  func.func @transform_4(%arg0: i32) -> (i32, i32) {
    %c0_i32 = arith.constant 0 : i32
    %c0_i32_0 = arith.constant 0 : i32
    %c0_i32_1 = arith.constant 0 : i32
    return %c0_i32, %c0_i32_0 : i32, i32
  }
  func.func @transform_5(%arg0: i32) -> (i32, i32) {
    %c0_i32 = arith.constant 0 : i32
    %c0_i32_0 = arith.constant 0 : i32
    %c0_i32_1 = arith.constant 0 : i32
    return %c0_i32, %c0_i32_0 : i32, i32
  }
  func.func @transform_6(%arg0: i32) -> (i32, i32) {
    %c0_i32 = arith.constant 0 : i32
    %c0_i32_0 = arith.constant 0 : i32
    %c0_i32_1 = arith.constant 0 : i32
    return %c0_i32, %c0_i32_0 : i32, i32
  }
  func.func @transform_7(%arg0: i32) -> (i32, i32) {
    %c0_i32 = arith.constant 0 : i32
    %c0_i32_0 = arith.constant 0 : i32
    return %c0_i32, %arg0 : i32, i32
  }
}

</mosaic_0001>

<llo_original>
// kernel: fused_mlp_forward.1
$region0: #{fused_mlp_forward.1}
  #allocation0 [shape = 'u32[]', space=smem, size = 0x4, offset = 0x4, fixed_abs, tag = 'smem constant byte address 0x4 - core index']
  #allocation1 [shape = 'u32[144,128]{1,0:T(1,128)}', space=vmem, size = 0x12000, scoped, tag = 'internal scratch']
  %s0 = inlined_call_operand.vmem [shape: f32[32,256], index: 0, kind: input, shape index: {}]
  %s1 = inlined_call_operand.vmem [shape: f32[64,32], index: 1, kind: input, shape index: {}]
  %s2 = inlined_call_operand.vmem [shape: f32[64,1], index: 2, kind: input, shape index: {}]
  %s3 = inlined_call_operand.vmem [shape: f32[48,64], index: 3, kind: input, shape index: {}]
  %s4 = inlined_call_operand.vmem [shape: f32[48,1], index: 4, kind: input, shape index: {}]
  %s5 = inlined_call_operand.vmem [shape: f32[16,48], index: 5, kind: input, shape index: {}]
  %s6 = inlined_call_operand.vmem [shape: f32[16,1], index: 6, kind: input, shape index: {}]
  %s7 = inlined_call_operand.hbm [shape: f32[16,256], index: 7, kind: output, shape index: {}]
  %s8 = sld [smem:[#allocation0]]
  $region99: #{fused_mlp_forward.1} parent=0
    _
  %s10 = ssub.s32 1, %s8
  %s11 = scalar_select 0, %s10, %s8
  $region1: #{fused_mlp_forward.1} parent=0
    #allocation2 [shape = 'u8[32768]{0}', space=vmem, size = 0x8000, scoped, tag = 'input window, operand 0']
    #allocation3 [shape = 'u8[16384]{0}', space=vmem, size = 0x4000, scoped, tag = 'output window, operand 0']
    #allocation4 [shape = 's32[2]{0}', space=sflag, size = 0x8, scoped, tag = 'scoped memory for fused_mlp_forward.1']
    %12 = vsyncpa [#allocation4], 0
    %s13 = scalar_lea.sflag [#allocation4], 1
    %14 = vsyncpa %s13, 0
    loop: start=0, step=1, limit=4
    $region2: #{fused_mlp_forward.1} parent=1 // loop_pre_header
      _
    $region3: #{fused_mlp_forward.1} parent=1 // loop_header
      %s16 = sphi 0, %s20
      %p17 = scmp.ge.s32.totalorder %s16, 4
      %s26 = sphi 0, %s28
      %s29 = sphi 0, %s26
      %s30 = sphi 0, %s29
      %s46 = sphi 0, %s30
      %s50 = sphi 0, %s50
      %s52 = sphi 0, %s50
      %s53 = sphi 0, %s52
      %s67 = sphi 0, %s53
      %s71 = sphi 0, %s71
      %s73 = sphi 0, %s71
      %s74 = sphi 0, %s73
      %s88 = sphi 0, %s74
      %s92 = sphi 0, %s92
      %s94 = sphi 0, %s92
      %s95 = sphi 0, %s94
      %s109 = sphi 0, %s95
      %s113 = sphi 0, %s113
      %s115 = sphi 0, %s113
      %s116 = sphi 0, %s115
      %s130 = sphi 0, %s116
      %s134 = sphi 0, %s134
      %s136 = sphi 0, %s134
      %s137 = sphi 0, %s136
      %s151 = sphi 0, %s137
      %s155 = sphi 0, %s155
      %s157 = sphi 0, %s155
      %s158 = sphi 0, %s157
      %s172 = sphi 0, %s158
      %s178 = sphi 0, %s180
      %s181 = sphi 0, %s178
      %s182 = sphi 0, %s181
      %s198 = sphi 0, %s182
    $region4: #{fused_mlp_forward.1} parent=1 // loop_header_branch
      %19 = sbr.rel (%p17) target = $region8
    $region5: #{fused_mlp_forward.1} parent=1 // loop_body
      %s21 = ssub.s32 %s16, 1
      %s22 = ssub.s32 %s16, 2
      %s23 = sadd.s32 %s16, 1
      %s24 = ssub.s32 %s16, %s23
      %p25 = scmp.eq.s32.totalorder %s24, 0
      %s27 = sadd.s32 %s26, 1
      %s28 = scalar_select %p25, %s26, %s27
      %p31 = pneg %p25
      %p32 = scmp.eq.s32.totalorder %s16, 1
      %p33 = por %p31, %p32
      %p34 = scmp.ne.s32.totalorder %s26, %s29
      %p35 = scmp.eq.s32.totalorder %s16, 0
      %p36 = por %p34, %p35
      %p37 = scmp.ne.s32.totalorder %s26, %s29
      %p38 = scmp.eq.s32.totalorder %s21, 1
      %p39 = por %p37, %p38
      %p40 = scmp.ne.s32.totalorder %s29, %s30
      %p41 = scmp.eq.s32.totalorder %s21, 0
      %p42 = por %p40, %p41
      %p43 = scmp.ne.s32.totalorder %s29, %s30
      %p44 = scmp.eq.s32.totalorder %s22, 1
      %p45 = por %p43, %p44
      %p47 = scmp.ne.s32.totalorder %s30, %s46
      %p48 = scmp.eq.s32.totalorder %s22, 0
      %p49 = por %p47, %p48
      %s51 = sadd.s32 %s50, 1
      %p54 = scmp.eq.s32.totalorder %s16, 1
      %p55 = scmp.ne.s32.totalorder %s50, %s52
      %p56 = scmp.eq.s32.totalorder %s16, 0
      %p57 = por %p55, %p56
      %p58 = scmp.ne.s32.totalorder %s50, %s52
      %p59 = scmp.eq.s32.totalorder %s21, 1
      %p60 = por %p58, %p59
      %p61 = scmp.ne.s32.totalorder %s52, %s53
      %p62 = scmp.eq.s32.totalorder %s21, 0
      %p63 = por %p61, %p62
      %p64 = scmp.ne.s32.totalorder %s52, %s53
      %p65 = scmp.eq.s32.totalorder %s22, 1
      %p66 = por %p64, %p65
      %p68 = scmp.ne.s32.totalorder %s53, %s67
      %p69 = scmp.eq.s32.totalorder %s22, 0
      %p70 = por %p68, %p69
      %s72 = sadd.s32 %s71, 1
      %p75 = scmp.eq.s32.totalorder %s16, 1
      %p76 = scmp.ne.s32.totalorder %s71, %s73
      %p77 = scmp.eq.s32.totalorder %s16, 0
      %p78 = por %p76, %p77
      %p79 = scmp.ne.s32.totalorder %s71, %s73
      %p80 = scmp.eq.s32.totalorder %s21, 1
      %p81 = por %p79, %p80
      %p82 = scmp.ne.s32.totalorder %s73, %s74
      %p83 = scmp.eq.s32.totalorder %s21, 0
      %p84 = por %p82, %p83
      %p85 = scmp.ne.s32.totalorder %s73, %s74
      %p86 = scmp.eq.s32.totalorder %s22, 1
      %p87 = por %p85, %p86
      %p89 = scmp.ne.s32.totalorder %s74, %s88
      %p90 = scmp.eq.s32.totalorder %s22, 0
      %p91 = por %p89, %p90
      %s93 = sadd.s32 %s92, 1
      %p96 = scmp.eq.s32.totalorder %s16, 1
      %p97 = scmp.ne.s32.totalorder %s92, %s94
      %p98 = scmp.eq.s32.totalorder %s16, 0
      %p99 = por %p97, %p98
      %p100 = scmp.ne.s32.totalorder %s92, %s94
      %p101 = scmp.eq.s32.totalorder %s21, 1
      %p102 = por %p100, %p101
      %p103 = scmp.ne.s32.totalorder %s94, %s95
      %p104 = scmp.eq.s32.totalorder %s21, 0
      %p105 = por %p103, %p104
      %p106 = scmp.ne.s32.totalorder %s94, %s95
      %p107 = scmp.eq.s32.totalorder %s22, 1
      %p108 = por %p106, %p107
      %p110 = scmp.ne.s32.totalorder %s95, %s109
      %p111 = scmp.eq.s32.totalorder %s22, 0
      %p112 = por %p110, %p111
      %s114 = sadd.s32 %s113, 1
      %p117 = scmp.eq.s32.totalorder %s16, 1
      %p118 = scmp.ne.s32.totalorder %s113, %s115
      %p119 = scmp.eq.s32.totalorder %s16, 0
      %p120 = por %p118, %p119
      %p121 = scmp.ne.s32.totalorder %s113, %s115
      %p122 = scmp.eq.s32.totalorder %s21, 1
      %p123 = por %p121, %p122
      %p124 = scmp.ne.s32.totalorder %s115, %s116
      %p125 = scmp.eq.s32.totalorder %s21, 0
      %p126 = por %p124, %p125
      %p127 = scmp.ne.s32.totalorder %s115, %s116
      %p128 = scmp.eq.s32.totalorder %s22, 1
      %p129 = por %p127, %p128
      %p131 = scmp.ne.s32.totalorder %s116, %s130
      %p132 = scmp.eq.s32.totalorder %s22, 0
      %p133 = por %p131, %p132
      %s135 = sadd.s32 %s134, 1
      %p138 = scmp.eq.s32.totalorder %s16, 1
      %p139 = scmp.ne.s32.totalorder %s134, %s136
      %p140 = scmp.eq.s32.totalorder %s16, 0
      %p141 = por %p139, %p140
      %p142 = scmp.ne.s32.totalorder %s134, %s136
      %p143 = scmp.eq.s32.totalorder %s21, 1
      %p144 = por %p142, %p143
      %p145 = scmp.ne.s32.totalorder %s136, %s137
      %p146 = scmp.eq.s32.totalorder %s21, 0
      %p147 = por %p145, %p146
      %p148 = scmp.ne.s32.totalorder %s136, %s137
      %p149 = scmp.eq.s32.totalorder %s22, 1
      %p150 = por %p148, %p149
      %p152 = scmp.ne.s32.totalorder %s137, %s151
      %p153 = scmp.eq.s32.totalorder %s22, 0
      %p154 = por %p152, %p153
      %s156 = sadd.s32 %s155, 1
      %p159 = scmp.eq.s32.totalorder %s16, 1
      %p160 = scmp.ne.s32.totalorder %s155, %s157
      %p161 = scmp.eq.s32.totalorder %s16, 0
      %p162 = por %p160, %p161
      %p163 = scmp.ne.s32.totalorder %s155, %s157
      %p164 = scmp.eq.s32.totalorder %s21, 1
      %p165 = por %p163, %p164
      %p166 = scmp.ne.s32.totalorder %s157, %s158
      %p167 = scmp.eq.s32.totalorder %s21, 0
      %p168 = por %p166, %p167
      %p169 = scmp.ne.s32.totalorder %s157, %s158
      %p170 = scmp.eq.s32.totalorder %s22, 1
      %p171 = por %p169, %p170
      %p173 = scmp.ne.s32.totalorder %s158, %s172
      %p174 = scmp.eq.s32.totalorder %s22, 0
      %p175 = por %p173, %p174
      %s176 = ssub.s32 %s16, %s23
      %p177 = scmp.eq.s32.totalorder %s176, 0
      %s179 = sadd.s32 %s178, 1
      %s180 = scalar_select %p177, %s178, %s179
      %p183 = pneg %p177
      %p184 = scmp.eq.s32.totalorder %s16, 1
      %p185 = por %p183, %p184
      %p186 = scmp.ne.s32.totalorder %s178, %s181
      %p187 = scmp.eq.s32.totalorder %s16, 0
      %p188 = por %p186, %p187
      %p189 = scmp.ne.s32.totalorder %s178, %s181
      %p190 = scmp.eq.s32.totalorder %s21, 1
      %p191 = por %p189, %p190
      %p192 = scmp.ne.s32.totalorder %s181, %s182
      %p193 = scmp.eq.s32.totalorder %s21, 0
      %p194 = por %p192, %p193
      %p195 = scmp.ne.s32.totalorder %s181, %s182
      %p196 = scmp.eq.s32.totalorder %s22, 1
      %p197 = por %p195, %p196
      %p199 = scmp.ne.s32.totalorder %s182, %s198
      %p200 = scmp.eq.s32.totalorder %s22, 0
      %p201 = por %p199, %p200
      %p202 = scmp.le.s32.totalorder 1, %s16
      %p203 = scmp.lt.s32.totalorder %s16, 3
      %p204 = pnand %p202, %p203
      %p205 = pneg %p204
      // Predicated region
      $region9: #{fused_mlp_forward.1} parent=5 // pred_check
        _
      $region10: #{fused_mlp_forward.1} parent=5 // pred_check_branch
        %207 = sbr.rel (%p204) target = $region12
      $region11: #{fused_mlp_forward.1} parent=5 // pred_region
        %s208 = ssub.s32 %s16, 1
        // Predicated region
        $region13: #{fused_mlp_forward.1} parent=11 // pred_check
          %p209 = pneg %p63
        $region14: #{fused_mlp_forward.1} parent=11 // pred_check_branch
          %211 = sbr.rel (%p209) target = $region16
        $region15: #{fused_mlp_forward.1} parent=11 // pred_region
          _
        $region16: #{fused_mlp_forward.1} parent=11 // pred_fallthru
          _
        // Predicated region
        $region17: #{fused_mlp_forward.1} parent=11 // pred_check
          %p212 = pneg %p84
        $region18: #{fused_mlp_forward.1} parent=11 // pred_check_branch
          %214 = sbr.rel (%p212) target = $region20
        $region19: #{fused_mlp_forward.1} parent=11 // pred_region
          _
        $region20: #{fused_mlp_forward.1} parent=11 // pred_fallthru
          _
        // Predicated region
        $region21: #{fused_mlp_forward.1} parent=11 // pred_check
          %p215 = pneg %p105
        $region22: #{fused_mlp_forward.1} parent=11 // pred_check_branch
          %217 = sbr.rel (%p215) target = $region24
        $region23: #{fused_mlp_forward.1} parent=11 // pred_region
          _
        $region24: #{fused_mlp_forward.1} parent=11 // pred_fallthru
          _
        // Predicated region
        $region25: #{fused_mlp_forward.1} parent=11 // pred_check
          %p218 = pneg %p126
        $region26: #{fused_mlp_forward.1} parent=11 // pred_check_branch
          %220 = sbr.rel (%p218) target = $region28
        $region27: #{fused_mlp_forward.1} parent=11 // pred_region
          _
        $region28: #{fused_mlp_forward.1} parent=11 // pred_fallthru
          _
        // Predicated region
        $region29: #{fused_mlp_forward.1} parent=11 // pred_check
          %p221 = pneg %p147
        $region30: #{fused_mlp_forward.1} parent=11 // pred_check_branch
          %223 = sbr.rel (%p221) target = $region32
        $region31: #{fused_mlp_forward.1} parent=11 // pred_region
          _
        $region32: #{fused_mlp_forward.1} parent=11 // pred_fallthru
          _
        // Predicated region
        $region33: #{fused_mlp_forward.1} parent=11 // pred_check
          %p224 = pneg %p168
        $region34: #{fused_mlp_forward.1} parent=11 // pred_check_branch
          %226 = sbr.rel (%p224) target = $region36
        $region35: #{fused_mlp_forward.1} parent=11 // pred_region
          _
        $region36: #{fused_mlp_forward.1} parent=11 // pred_fallthru
          _
      $region12: #{fused_mlp_forward.1} parent=5 // pred_fallthru
        _
      %p227 = scmp.lt.s32.totalorder %s16, 2
      // Predicated region
      $region37: #{fused_mlp_forward.1} parent=5 // pred_check
        %p228 = pneg %p227
      $region38: #{fused_mlp_forward.1} parent=5 // pred_check_branch
        %230 = sbr.rel (%p228) target = $region40
      $region39: #{fused_mlp_forward.1} parent=5 // pred_region
        // Predicated region
        $region41: #{fused_mlp_forward.1} parent=39 // pred_check
          %p231 = pneg %p36
        $region42: #{fused_mlp_forward.1} parent=39 // pred_check_branch
          %233 = sbr.rel (%p231) target = $region44
        $region43: #{fused_mlp_forward.1} parent=39 // pred_region
          %s234 = sand.u32 %s26, 1
          %s235 = sand.u32 %s26, 1
          %s236 = smul.addr %s235, 32
          %s237 = scalar_lea.vmem [#allocation2], %s236
          %s238 = smul.addr %s16, 8
          %s239 = scalar_lea.vmem %s0, %s238
          // Predicated region
          $region45: #{fused_mlp_forward.1} parent=43 // pred_check
            _
          $region46: #{fused_mlp_forward.1} parent=43 // pred_check_branch
            %241 = sbr.rel (0) target = $region48
          $region47: #{fused_mlp_forward.1} parent=43 // pred_region
            // Predicated region
            $region49: #{fused_mlp_forward.1} parent=47 // pred_check
              _
            $region50: #{fused_mlp_forward.1} parent=47 // pred_check_branch
              %243 = sbr.rel (0) target = $region52
            $region51: #{fused_mlp_forward.1} parent=47 // pred_region
              // Predicated region
              $region64: #{fused_mlp_forward.1} parent=51 // pred_check
                _
              $region65: #{fused_mlp_forward.1} parent=51 // pred_check_branch
                %265 = sbr.rel (0) target = $region67
              $region66: #{fused_mlp_forward.1} parent=51 // pred_region
                loop: start=0, step=1, limit=1
                $region68: #{fused_mlp_forward.1} parent=66 // loop_pre_header
                  _
                $region69: #{fused_mlp_forward.1} parent=66 // loop_header
                  %s267 = sphi 0, %s271
                  %p268 = scmp.ge.s32.totalorder %s267, 1
                  %s272 = sphi %s239, %s239
                  %s273 = sphi %s237, %s237
                $region70: #{fused_mlp_forward.1} parent=66 // loop_header_branch
                  %270 = sbr.rel (%p268) target = $region74
                $region71: #{fused_mlp_forward.1} parent=66 // loop_body
                  %v274 = vld [vmem:[%s272] sm:$0xff]
                  %275 = vst [vmem:[%s273] sm:$0xff] %v274
                  %v276 = vld [vmem:[%s272 + $0x10] sm:$0xff]
                  %277 = vst [vmem:[%s273 + $0x8] sm:$0xff] %v276
                  %v278 = vld [vmem:[%s272 + $0x20] sm:$0xff]
                  %279 = vst [vmem:[%s273 + $0x10] sm:$0xff] %v278
                  %v280 = vld [vmem:[%s272 + $0x30] sm:$0xff]
                  %281 = vst [vmem:[%s273 + $0x18] sm:$0xff] %v280
                $region72: #{fused_mlp_forward.1} parent=66 // loop_footer
                  %s271 = sadd.s32 1, %s267
                $region73: #{fused_mlp_forward.1} parent=66 // loop_footer_branch
                  %266 = sbr.rel target = $region69
                $region74: #{fused_mlp_forward.1} parent=66 // loop_exit
                  _
              $region67: #{fused_mlp_forward.1} parent=51 // pred_fallthru
                _
              // Predicated region
              $region75: #{fused_mlp_forward.1} parent=51 // pred_check
                _
              $region76: #{fused_mlp_forward.1} parent=51 // pred_check_branch
                %283 = sbr.rel target = $region78
              $region77: #{fused_mlp_forward.1} parent=51 // pred_region
                _
              $region78: #{fused_mlp_forward.1} parent=51 // pred_fallthru
                _
            $region52: #{fused_mlp_forward.1} parent=47 // pred_fallthru
              _
            // Predicated region
            $region53: #{fused_mlp_forward.1} parent=47 // pred_check
              _
            $region54: #{fused_mlp_forward.1} parent=47 // pred_check_branch
              %245 = sbr.rel target = $region56
            $region55: #{fused_mlp_forward.1} parent=47 // pred_region
              %s247 = ssub.s32 256, 1
              loop: start=0, step=1, limit=1
              $region57: #{fused_mlp_forward.1} parent=55 // loop_pre_header
                _
              $region58: #{fused_mlp_forward.1} parent=55 // loop_header
                %s249 = sphi 0, %s253
                %p250 = scmp.ge.s32.totalorder %s249, 1
                %s254 = sphi %s239, %s239
                %s255 = sphi %s237, %s237
              $region59: #{fused_mlp_forward.1} parent=55 // loop_header_branch
                %252 = sbr.rel (%p250) target = $region63
              $region60: #{fused_mlp_forward.1} parent=55 // loop_body
                %v256 = vld [vmem:[%s254] sm:%s247]
                %257 = vst [vmem:[%s255] sm:%s247] %v256
                %v258 = vld [vmem:[%s254 + $0x10] sm:%s247]
                %259 = vst [vmem:[%s255 + $0x8] sm:%s247] %v258
                %v260 = vld [vmem:[%s254 + $0x20] sm:%s247]
                %261 = vst [vmem:[%s255 + $0x10] sm:%s247] %v260
                %v262 = vld [vmem:[%s254 + $0x30] sm:%s247]
                %263 = vst [vmem:[%s255 + $0x18] sm:%s247] %v262
              $region61: #{fused_mlp_forward.1} parent=55 // loop_footer
                %s253 = sadd.s32 1, %s249
              $region62: #{fused_mlp_forward.1} parent=55 // loop_footer_branch
                %248 = sbr.rel target = $region58
              $region63: #{fused_mlp_forward.1} parent=55 // loop_exit
                _
            $region56: #{fused_mlp_forward.1} parent=47 // pred_fallthru
              _
          $region48: #{fused_mlp_forward.1} parent=43 // pred_fallthru
            _
          %284 = vnop
        $region44: #{fused_mlp_forward.1} parent=39 // pred_fallthru
          _
      $region40: #{fused_mlp_forward.1} parent=5 // pred_fallthru
        _
      %p285 = scmp.le.s32.totalorder 1, %s16
      %p286 = scmp.lt.s32.totalorder %s16, 3
      %p287 = pnand %p285, %p286
      %p288 = pneg %p287
      // Predicated region
      $region79: #{fused_mlp_forward.1} parent=5 // pred_check
        _
      $region80: #{fused_mlp_forward.1} parent=5 // pred_check_branch
        %290 = sbr.rel (%p287) target = $region82
      $region81: #{fused_mlp_forward.1} parent=5 // pred_region
        %s291 = ssub.s32 %s16, 1
        %s292 = sand.u32 %s29, 1
        %s293 = sand.u32 %s29, 1
        %s294 = smul.addr %s293, 32
        %s295 = scalar_lea.vmem [#allocation2], %s294
        // Predicated region
        $region83: #{fused_mlp_forward.1} parent=81 // pred_check
          %p296 = pneg %p42
        $region84: #{fused_mlp_forward.1} parent=81 // pred_check_branch
          %298 = sbr.rel (%p296) target = $region86
        $region85: #{fused_mlp_forward.1} parent=81 // pred_region
          _
        $region86: #{fused_mlp_forward.1} parent=81 // pred_fallthru
          _
        %s299 = sand.u32 %s29, 1
        %s300 = sand.u32 %s29, 1
        %s301 = smul.addr %s300, 32
        %s302 = scalar_lea.vmem [#allocation2], %s301
        %p303 = pneg %p42
        %p304 = pneg %p39
        %p305 = pneg %p63
        %p306 = pneg %p60
        %p307 = pneg %p84
        %p308 = pneg %p81
        %p309 = pneg %p105
        %p310 = pneg %p102
        %p311 = pneg %p126
        %p312 = pneg %p123
        %p313 = pneg %p147
        %p314 = pneg %p144
        %p315 = pneg %p168
        %p316 = pneg %p165
        %p317 = pneg %p194
        %p318 = pneg %p191
        %s319 = sand.u32 %s181, 1
        %s320 = scalar_lea.sflag [#allocation4], %s319
        %s321 = sand.u32 %s181, 1
        %s322 = smul.addr %s321, 16
        %s323 = scalar_lea.vmem [#allocation3], %s322
        %v324 = vld [vmem:[%s295] sm:$0xff]
        %v325 = vld [vmem:[%s295 + $0x8] sm:$0xff]
        %v326 = vld [vmem:[%s295 + $0x10] sm:$0xff]
        %v327 = vld [vmem:[%s295 + $0x18] sm:$0xff]
        %v328 = vld [vmem:[%s1] sm:$0xff]
        %v329 = vld [vmem:[%s1 + $0x8] sm:$0xff]
        %v330 = vld [vmem:[%s1 + $0x10] sm:$0xff]
        %v331 = vld [vmem:[%s1 + $0x18] sm:$0xff]
        %v332 = vld [vmem:[%s1 + $0x20] sm:$0xff]
        %v333 = vld [vmem:[%s1 + $0x28] sm:$0xff]
        %v334 = vld [vmem:[%s1 + $0x30] sm:$0xff]
        %v335 = vld [vmem:[%s1 + $0x38] sm:$0xff]
        %v336 = vld [vmem:[%s2] sm:$0xff]
        %v337 = vld [vmem:[%s2 + $0x8] sm:$0xff]
        %v338 = vld [vmem:[%s2 + $0x10] sm:$0xff]
        %v339 = vld [vmem:[%s2 + $0x18] sm:$0xff]
        %v340 = vld [vmem:[%s2 + $0x20] sm:$0xff]
        %v341 = vld [vmem:[%s2 + $0x28] sm:$0xff]
        %v342 = vld [vmem:[%s2 + $0x30] sm:$0xff]
        %v343 = vld [vmem:[%s2 + $0x38] sm:$0xff]
        %345 = vset.pattern.permute.xlu0 0
        %346 = vperm.xlu0 %345, %v336
        %v347 = vpop.permute.xlu0 %346
        %350 = vset.pattern.permute.xlu0 0
        %351 = vperm.xlu0 %350, %v337
        %v352 = vpop.permute.xlu0 %351
        %355 = vset.pattern.permute.xlu0 0
        %356 = vperm.xlu0 %355, %v338
        %v357 = vpop.permute.xlu0 %356
        %360 = vset.pattern.permute.xlu0 0
        %361 = vperm.xlu0 %360, %v339
        %v362 = vpop.permute.xlu0 %361
        %365 = vset.pattern.permute.xlu0 0
        %366 = vperm.xlu0 %365, %v340
        %v367 = vpop.permute.xlu0 %366
        %370 = vset.pattern.permute.xlu0 0
        %371 = vperm.xlu0 %370, %v341
        %v372 = vpop.permute.xlu0 %371
        %375 = vset.pattern.permute.xlu0 0
        %376 = vperm.xlu0 %375, %v342
        %v377 = vpop.permute.xlu0 %376
        %380 = vset.pattern.permute.xlu0 0
        %381 = vperm.xlu0 %380, %v343
        %v382 = vpop.permute.xlu0 %381
        %vm384 = vcmask 261120
        %v386 = vsel %vm384, %v328, 0
        %v389 = vsel %vm384, %v329, 0
        %v392 = vsel %vm384, %v330, 0
        %v395 = vsel %vm384, %v331, 0
        %v398 = vsel %vm384, %v332, 0
        %v401 = vsel %vm384, %v333, 0
        %v404 = vsel %vm384, %v334, 0
        %v407 = vsel %vm384, %v335, 0
        %409 = vmatprep.subr.mxu0 0.0
        %410 = vmatpush1.msra.mxu0 0.0
        %411 = vmatprep.subr.mxu0 0.0
        %412 = vmatpush1.msra.mxu0 0.0
        %413 = vmatprep.subr.mxu0 0.0
        %414 = vmatpush1.msra.mxu0 0.0
        %415 = vmatprep.subr.mxu0 0.0
        %416 = vmatpush1.msra.mxu0 0.0
        %417 = vmatprep.subr.mxu0 0.0
        %418 = vmatpush1.msra.mxu0 0.0
        %419 = vmatprep.subr.mxu0 0.0
        %420 = vmatpush1.msra.mxu0 0.0
        %421 = vmatprep.subr.mxu0 0.0
        %422 = vmatpush1.msra.mxu0 0.0
        %423 = vmatprep.subr.mxu0 0.0
        %424 = vmatpush1.msra.mxu0 0.0
        %425 = vmatprep.subr.mxu0 0.0
        %426 = vmatpush1.msra.mxu0 0.0
        %427 = vmatprep.subr.mxu0 0.0
        %428 = vmatpush1.msra.mxu0 0.0
        %429 = vmatprep.subr.mxu0 0.0
        %430 = vmatpush1.msra.mxu0 0.0
        %431 = vmatprep.subr.mxu0 0.0
        %432 = vmatpush1.msra.mxu0 0.0
        %433 = vmatprep.subr.mxu0 0.0
        %434 = vmatpush1.msra.mxu0 %v327
        %435 = vmatprep.subr.mxu0 0.0
        %436 = vmatpush1.msra.mxu0 %v326
        %437 = vmatprep.subr.mxu0 0.0
        %438 = vmatpush1.msra.mxu0 %v325
        %439 = vmatprep.subr.mxu0 0.0
        %440 = vmatpush1.msra.mxu0 %v324
        %441 = vmatprep.subr.mxu0 0.0
        %442 = vmatpush2.msra.mxu0 0.0
        %443 = vmatprep.subr.mxu0 0.0
        %444 = vmatpush2.msra.mxu0 0.0
        %445 = vmatprep.subr.mxu0 0.0
        %446 = vmatpush2.msra.mxu0 0.0
        %447 = vmatprep.subr.mxu0 0.0
        %448 = vmatpush2.msra.mxu0 0.0
        %449 = vmatprep.subr.mxu0 0.0
        %450 = vmatpush2.msra.mxu0 0.0
        %451 = vmatprep.subr.mxu0 0.0
        %452 = vmatpush2.msra.mxu0 0.0
        %453 = vmatprep.subr.mxu0 0.0
        %454 = vmatpush2.msra.mxu0 0.0
        %455 = vmatprep.subr.mxu0 0.0
        %456 = vmatpush2.msra.mxu0 0.0
        %457 = vmatprep.subr.mxu0 0.0
        %458 = vmatpush2.msra.mxu0 0.0
        %459 = vmatprep.subr.mxu0 0.0
        %460 = vmatpush2.msra.mxu0 0.0
        %461 = vmatprep.subr.mxu0 0.0
        %462 = vmatpush2.msra.mxu0 0.0
        %463 = vmatprep.subr.mxu0 0.0
        %464 = vmatpush2.msra.mxu0 0.0
        %465 = vmatprep.subr.mxu0 0.0
        %466 = vmatpush2.msra.mxu0 0.0
        %467 = vmatprep.subr.mxu0 0.0
        %468 = vmatpush2.msra.mxu0 0.0
        %469 = vmatprep.subr.mxu0 0.0
        %470 = vmatpush2.msra.mxu0 0.0
        %471 = vmatprep.subr.mxu0 0.0
        %472 = vmatpush2.msra.mxu0 0.0
        %473 = vmatprep.mubr.f32.mxu0 0.0
        %474 = vmatmul.mubr.f32.gmra.mxu0 %v386
        %v475 = vpop.f32.mrf.mxu0
        %v476 = vadd.f32 %v347, %v475
        %v477 = vpop.f32.mrf.mxu0
        %478 = vmatprep.mubr.f32.mxu0 0.0
        %479 = vmatmul.mubr.f32.gmra.mxu0 %v389
        %v480 = vpop.f32.mrf.mxu0
        %v481 = vadd.f32 %v352, %v480
        %v482 = vpop.f32.mrf.mxu0
        %483 = vmatprep.mubr.f32.mxu0 0.0
        %484 = vmatmul.mubr.f32.gmra.mxu0 %v392
        %v485 = vpop.f32.mrf.mxu0
        %v486 = vadd.f32 %v357, %v485
        %v487 = vpop.f32.mrf.mxu0
        %488 = vmatprep.mubr.f32.mxu0 0.0
        %489 = vmatmul.mubr.f32.gmra.mxu0 %v395
        %v490 = vpop.f32.mrf.mxu0
        %v491 = vadd.f32 %v362, %v490
        %v492 = vpop.f32.mrf.mxu0
        %493 = vmatprep.mubr.f32.mxu0 0.0
        %494 = vmatmul.mubr.f32.gmra.mxu0 %v398
        %v495 = vpop.f32.mrf.mxu0
        %v496 = vadd.f32 %v367, %v495
        %v497 = vpop.f32.mrf.mxu0
        %498 = vmatprep.mubr.f32.mxu0 0.0
        %499 = vmatmul.mubr.f32.gmra.mxu0 %v401
        %v500 = vpop.f32.mrf.mxu0
        %v501 = vadd.f32 %v372, %v500
        %v502 = vpop.f32.mrf.mxu0
        %503 = vmatprep.mubr.f32.mxu0 0.0
        %504 = vmatmul.mubr.f32.gmra.mxu0 %v404
        %v505 = vpop.f32.mrf.mxu0
        %v506 = vadd.f32 %v377, %v505
        %v507 = vpop.f32.mrf.mxu0
        %508 = vmatprep.mubr.f32.mxu0 0.0
        %509 = vmatmul.mubr.f32.gmra.mxu0 %v407
        %v510 = vpop.f32.mrf.mxu0
        %v511 = vadd.f32 %v382, %v510
        %v512 = vpop.f32.mrf.mxu0
        %513 = vdwg.mxu0
        %v514 = vmax.f32 %v476, 0.0
        %v515 = vmax.f32 %v481, 0.0
        %v516 = vmax.f32 %v486, 0.0
        %v517 = vmax.f32 %v491, 0.0
        %v518 = vmax.f32 %v496, 0.0
        %v519 = vmax.f32 %v501, 0.0
        %v520 = vmax.f32 %v506, 0.0
        %v521 = vmax.f32 %v511, 0.0
        %v522 = vld [vmem:[%s3] sm:$0xff]
        %v523 = vld [vmem:[%s3 + $0x8] sm:$0xff]
        %v524 = vld [vmem:[%s3 + $0x10] sm:$0xff]
        %v525 = vld [vmem:[%s3 + $0x18] sm:$0xff]
        %v526 = vld [vmem:[%s3 + $0x20] sm:$0xff]
        %v527 = vld [vmem:[%s3 + $0x28] sm:$0xff]
        %v528 = vld [vmem:[%s4] sm:$0xff]
        %v529 = vld [vmem:[%s4 + $0x8] sm:$0xff]
        %v530 = vld [vmem:[%s4 + $0x10] sm:$0xff]
        %v531 = vld [vmem:[%s4 + $0x18] sm:$0xff]
        %v532 = vld [vmem:[%s4 + $0x20] sm:$0xff]
        %v533 = vld [vmem:[%s4 + $0x28] sm:$0xff]
        %535 = vset.pattern.permute.xlu0 0
        %536 = vperm.xlu0 %535, %v528
        %v537 = vpop.permute.xlu0 %536
        %540 = vset.pattern.permute.xlu0 0
        %541 = vperm.xlu0 %540, %v529
        %v542 = vpop.permute.xlu0 %541
        %545 = vset.pattern.permute.xlu0 0
        %546 = vperm.xlu0 %545, %v530
        %v547 = vpop.permute.xlu0 %546
        %550 = vset.pattern.permute.xlu0 0
        %551 = vperm.xlu0 %550, %v531
        %v552 = vpop.permute.xlu0 %551
        %555 = vset.pattern.permute.xlu0 0
        %556 = vperm.xlu0 %555, %v532
        %v557 = vpop.permute.xlu0 %556
        %560 = vset.pattern.permute.xlu0 0
        %561 = vperm.xlu0 %560, %v533
        %v562 = vpop.permute.xlu0 %561
        %vm564 = vcmask 523264
        %v566 = vsel %vm564, %v522, 0
        %v569 = vsel %vm564, %v523, 0
        %v572 = vsel %vm564, %v524, 0
        %v575 = vsel %vm564, %v525, 0
        %v578 = vsel %vm564, %v526, 0
        %v581 = vsel %vm564, %v527, 0
        %583 = vmatprep.subr.mxu0 0.0
        %584 = vmatpush1.msra.mxu0 0.0
        %585 = vmatprep.subr.mxu0 0.0
        %586 = vmatpush1.msra.mxu0 0.0
        %587 = vmatprep.subr.mxu0 0.0
        %588 = vmatpush1.msra.mxu0 0.0
        %589 = vmatprep.subr.mxu0 0.0
        %590 = vmatpush1.msra.mxu0 0.0
        %591 = vmatprep.subr.mxu0 0.0
        %592 = vmatpush1.msra.mxu0 0.0
        %593 = vmatprep.subr.mxu0 0.0
        %594 = vmatpush1.msra.mxu0 0.0
        %595 = vmatprep.subr.mxu0 0.0
        %596 = vmatpush1.msra.mxu0 0.0
        %597 = vmatprep.subr.mxu0 0.0
        %598 = vmatpush1.msra.mxu0 0.0
        %599 = vmatprep.subr.mxu0 0.0
        %600 = vmatpush1.msra.mxu0 %v521
        %601 = vmatprep.subr.mxu0 0.0
        %602 = vmatpush1.msra.mxu0 %v520
        %603 = vmatprep.subr.mxu0 0.0
        %604 = vmatpush1.msra.mxu0 %v519
        %605 = vmatprep.subr.mxu0 0.0
        %606 = vmatpush1.msra.mxu0 %v518
        %607 = vmatprep.subr.mxu0 0.0
        %608 = vmatpush1.msra.mxu0 %v517
        %609 = vmatprep.subr.mxu0 0.0
        %610 = vmatpush1.msra.mxu0 %v516
        %611 = vmatprep.subr.mxu0 0.0
        %612 = vmatpush1.msra.mxu0 %v515
        %613 = vmatprep.subr.mxu0 0.0
        %614 = vmatpush1.msra.mxu0 %v514
        %615 = vmatprep.subr.mxu0 0.0
        %616 = vmatpush2.msra.mxu0 0.0
        %617 = vmatprep.subr.mxu0 0.0
        %618 = vmatpush2.msra.mxu0 0.0
        %619 = vmatprep.subr.mxu0 0.0
        %620 = vmatpush2.msra.mxu0 0.0
        %621 = vmatprep.subr.mxu0 0.0
        %622 = vmatpush2.msra.mxu0 0.0
        %623 = vmatprep.subr.mxu0 0.0
        %624 = vmatpush2.msra.mxu0 0.0
        %625 = vmatprep.subr.mxu0 0.0
        %626 = vmatpush2.msra.mxu0 0.0
        %627 = vmatprep.subr.mxu0 0.0
        %628 = vmatpush2.msra.mxu0 0.0
        %629 = vmatprep.subr.mxu0 0.0
        %630 = vmatpush2.msra.mxu0 0.0
        %631 = vmatprep.subr.mxu0 0.0
        %632 = vmatpush2.msra.mxu0 0.0
        %633 = vmatprep.subr.mxu0 0.0
        %634 = vmatpush2.msra.mxu0 0.0
        %635 = vmatprep.subr.mxu0 0.0
        %636 = vmatpush2.msra.mxu0 0.0
        %637 = vmatprep.subr.mxu0 0.0
        %638 = vmatpush2.msra.mxu0 0.0
        %639 = vmatprep.subr.mxu0 0.0
        %640 = vmatpush2.msra.mxu0 0.0
        %641 = vmatprep.subr.mxu0 0.0
        %642 = vmatpush2.msra.mxu0 0.0
        %643 = vmatprep.subr.mxu0 0.0
        %644 = vmatpush2.msra.mxu0 0.0
        %645 = vmatprep.subr.mxu0 0.0
        %646 = vmatpush2.msra.mxu0 0.0
        %647 = vmatprep.mubr.f32.mxu0 0.0
        %648 = vmatmul.mubr.f32.gmra.mxu0 %v566
        %v649 = vpop.f32.mrf.mxu0
        %v650 = vadd.f32 %v537, %v649
        %v651 = vpop.f32.mrf.mxu0
        %652 = vmatprep.mubr.f32.mxu0 0.0
        %653 = vmatmul.mubr.f32.gmra.mxu0 %v569
        %v654 = vpop.f32.mrf.mxu0
        %v655 = vadd.f32 %v542, %v654
        %v656 = vpop.f32.mrf.mxu0
        %657 = vmatprep.mubr.f32.mxu0 0.0
        %658 = vmatmul.mubr.f32.gmra.mxu0 %v572
        %v659 = vpop.f32.mrf.mxu0
        %v660 = vadd.f32 %v547, %v659
        %v661 = vpop.f32.mrf.mxu0
        %662 = vmatprep.mubr.f32.mxu0 0.0
        %663 = vmatmul.mubr.f32.gmra.mxu0 %v575
        %v664 = vpop.f32.mrf.mxu0
        %v665 = vadd.f32 %v552, %v664
        %v666 = vpop.f32.mrf.mxu0
        %667 = vmatprep.mubr.f32.mxu0 0.0
        %668 = vmatmul.mubr.f32.gmra.mxu0 %v578
        %v669 = vpop.f32.mrf.mxu0
        %v670 = vadd.f32 %v557, %v669
        %v671 = vpop.f32.mrf.mxu0
        %672 = vmatprep.mubr.f32.mxu0 0.0
        %673 = vmatmul.mubr.f32.gmra.mxu0 %v581
        %v674 = vpop.f32.mrf.mxu0
        %v675 = vadd.f32 %v562, %v674
        %v676 = vpop.f32.mrf.mxu0
        %677 = vdwg.mxu0
        %v678 = vmax.f32 %v650, 0.0
        %v679 = vmax.f32 %v655, 0.0
        %v680 = vmax.f32 %v660, 0.0
        %v681 = vmax.f32 %v665, 0.0
        %v682 = vmax.f32 %v670, 0.0
        %v683 = vmax.f32 %v675, 0.0
        %v684 = vld [vmem:[%s5] sm:$0xff]
        %v685 = vld [vmem:[%s5 + $0x8] sm:$0xff]
        %v686 = vld [vmem:[%s6] sm:$0xff]
        %v687 = vld [vmem:[%s6 + $0x8] sm:$0xff]
        %689 = vset.pattern.permute.xlu0 0
        %690 = vperm.xlu0 %689, %v686
        %v691 = vpop.permute.xlu0 %690
        %694 = vset.pattern.permute.xlu0 0
        %695 = vperm.xlu0 %694, %v687
        %v696 = vpop.permute.xlu0 %695
        %vm698 = vcmask 392192
        %v700 = vsel %vm698, %v684, 0
        %v703 = vsel %vm698, %v685, 0
        %705 = vmatprep.subr.mxu0 0.0
        %706 = vmatpush1.msra.mxu0 0.0
        %707 = vmatprep.subr.mxu0 0.0
        %708 = vmatpush1.msra.mxu0 0.0
        %709 = vmatprep.subr.mxu0 0.0
        %710 = vmatpush1.msra.mxu0 0.0
        %711 = vmatprep.subr.mxu0 0.0
        %712 = vmatpush1.msra.mxu0 0.0
        %713 = vmatprep.subr.mxu0 0.0
        %714 = vmatpush1.msra.mxu0 0.0
        %715 = vmatprep.subr.mxu0 0.0
        %716 = vmatpush1.msra.mxu0 0.0
        %717 = vmatprep.subr.mxu0 0.0
        %718 = vmatpush1.msra.mxu0 0.0
        %719 = vmatprep.subr.mxu0 0.0
        %720 = vmatpush1.msra.mxu0 0.0
        %721 = vmatprep.subr.mxu0 0.0
        %722 = vmatpush1.msra.mxu0 0.0
        %723 = vmatprep.subr.mxu0 0.0
        %724 = vmatpush1.msra.mxu0 0.0
        %725 = vmatprep.subr.mxu0 0.0
        %726 = vmatpush1.msra.mxu0 %v683
        %727 = vmatprep.subr.mxu0 0.0
        %728 = vmatpush1.msra.mxu0 %v682
        %729 = vmatprep.subr.mxu0 0.0
        %730 = vmatpush1.msra.mxu0 %v681
        %731 = vmatprep.subr.mxu0 0.0
        %732 = vmatpush1.msra.mxu0 %v680
        %733 = vmatprep.subr.mxu0 0.0
        %734 = vmatpush1.msra.mxu0 %v679
        %735 = vmatprep.subr.mxu0 0.0
        %736 = vmatpush1.msra.mxu0 %v678
        %737 = vmatprep.subr.mxu0 0.0
        %738 = vmatpush2.msra.mxu0 0.0
        %739 = vmatprep.subr.mxu0 0.0
        %740 = vmatpush2.msra.mxu0 0.0
        %741 = vmatprep.subr.mxu0 0.0
        %742 = vmatpush2.msra.mxu0 0.0
        %743 = vmatprep.subr.mxu0 0.0
        %744 = vmatpush2.msra.mxu0 0.0
        %745 = vmatprep.subr.mxu0 0.0
        %746 = vmatpush2.msra.mxu0 0.0
        %747 = vmatprep.subr.mxu0 0.0
        %748 = vmatpush2.msra.mxu0 0.0
        %749 = vmatprep.subr.mxu0 0.0
        %750 = vmatpush2.msra.mxu0 0.0
        %751 = vmatprep.subr.mxu0 0.0
        %752 = vmatpush2.msra.mxu0 0.0
        %753 = vmatprep.subr.mxu0 0.0
        %754 = vmatpush2.msra.mxu0 0.0
        %755 = vmatprep.subr.mxu0 0.0
        %756 = vmatpush2.msra.mxu0 0.0
        %757 = vmatprep.subr.mxu0 0.0
        %758 = vmatpush2.msra.mxu0 0.0
        %759 = vmatprep.subr.mxu0 0.0
        %760 = vmatpush2.msra.mxu0 0.0
        %761 = vmatprep.subr.mxu0 0.0
        %762 = vmatpush2.msra.mxu0 0.0
        %763 = vmatprep.subr.mxu0 0.0
        %764 = vmatpush2.msra.mxu0 0.0
        %765 = vmatprep.subr.mxu0 0.0
        %766 = vmatpush2.msra.mxu0 0.0
        %767 = vmatprep.subr.mxu0 0.0
        %768 = vmatpush2.msra.mxu0 0.0
        %769 = vmatprep.mubr.f32.mxu0 0.0
        %770 = vmatmul.mubr.f32.gmra.mxu0 %v700
        %v771 = vpop.f32.mrf.mxu0
        %v772 = vadd.f32 %v691, %v771
        %v773 = vpop.f32.mrf.mxu0
        %774 = vmatprep.mubr.f32.mxu0 0.0
        %775 = vmatmul.mubr.f32.gmra.mxu0 %v703
        %v776 = vpop.f32.mrf.mxu0
        %v777 = vadd.f32 %v696, %v776
        %v778 = vpop.f32.mrf.mxu0
        %779 = vdwg.mxu0
        %780 = vst [vmem:[%s323] sm:$0xff] %v772
        %781 = vst [vmem:[%s323 + $0x8] sm:$0xff] %v777
        %s782 = sand.u32 %s181, 1
        %s783 = scalar_lea.sflag [#allocation4], %s782
        %s784 = sand.u32 %s181, 1
        %s785 = smul.addr %s784, 16
        %s786 = scalar_lea.vmem [#allocation3], %s785
        // Predicated region
        $region87: #{fused_mlp_forward.1} parent=81 // pred_check
          %p787 = pneg %p191
        $region88: #{fused_mlp_forward.1} parent=81 // pred_check_branch
          %789 = sbr.rel (%p787) target = $region90
        $region89: #{fused_mlp_forward.1} parent=81 // pred_region
          %s791 = ssub.s32 256, 256
          %792 = vsyncadd %s783, %s791
          %s793 = smul.addr %s21, 128
          %s794 = scalar_lea.hbm %s7, %s793
          %s795 = sshll.u32 %s786, 4
          %s796 = int_to_ptr.vmem [resolvable:$true] %s795
          %801 = dma.vmem_to_hbm [thread:$0]  %s796, 256, %s794, %s783, 128, 256, 8
        $region90: #{fused_mlp_forward.1} parent=81 // pred_fallthru
          _
      $region82: #{fused_mlp_forward.1} parent=5 // pred_fallthru
        _
      %p802 = scmp.le.s32.totalorder 2, %s16
      // Predicated region
      $region91: #{fused_mlp_forward.1} parent=5 // pred_check
        %p803 = pneg %p802
      $region92: #{fused_mlp_forward.1} parent=5 // pred_check_branch
        %805 = sbr.rel (%p803) target = $region94
      $region93: #{fused_mlp_forward.1} parent=5 // pred_region
        %s806 = ssub.s32 %s16, 2
        // Predicated region
        $region95: #{fused_mlp_forward.1} parent=93 // pred_check
          %p807 = pneg %p197
        $region96: #{fused_mlp_forward.1} parent=93 // pred_check_branch
          %809 = sbr.rel (%p807) target = $region98
        $region97: #{fused_mlp_forward.1} parent=93 // pred_region
          %s810 = sand.u32 %s182, 1
          %s811 = scalar_lea.sflag [#allocation4], %s810
          %s812 = sand.u32 %s182, 1
          %s813 = smul.addr %s812, 16
          %s814 = scalar_lea.vmem [#allocation3], %s813
          %815 = dma.done %s811, 256
        $region98: #{fused_mlp_forward.1} parent=93 // pred_fallthru
          _
      $region94: #{fused_mlp_forward.1} parent=5 // pred_fallthru
        _
    $region6: #{fused_mlp_forward.1} parent=1 // loop_footer
      %s20 = sadd.s32 1, %s16
    $region7: #{fused_mlp_forward.1} parent=1 // loop_footer_branch
      %15 = sbr.rel target = $region3
    $region8: #{fused_mlp_forward.1} parent=1 // loop_exit
      _
    %816 = vsyncpa [#allocation4], 1
    %s817 = scalar_lea.sflag [#allocation4], 1
    %818 = vsyncpa %s817, 1

</llo_original>
